<compile_context>
chip_gen: v6e
topology: v6e:2x2x1
jax: 0.10.0
libtpu: 0.0.40
codegen_flags: <defaults>
</compile_context>

<pallas_src>
import math

import jax
import jax.numpy as jnp
from jax.experimental import pallas as pl
from jax.experimental.pallas import tpu as pltpu


def build_positional_encoding_table(d_model: int, max_len: int = 5000) -> jnp.ndarray:
    """Deterministic sin/cos table, identical math to the PyTorch __init__.

    Returns pe with shape [1, max_len, d_model] (float32)."""
    assert d_model % 2 == 0, "PositionalEncoding requires even d_model (as in the PyTorch original)"
    position = jnp.arange(0, max_len, dtype=jnp.float32)[:, None]              # [max_len, 1]
    div_term = jnp.exp(
        jnp.arange(0, d_model, 2, dtype=jnp.float32) * (-math.log(10000.0) / d_model)
    )                                                                           # [d_model//2]
    angles = position * div_term                                                # [max_len, d_model//2]
    pe = jnp.zeros((max_len, d_model), dtype=jnp.float32)
    pe = pe.at[:, 0::2].set(jnp.sin(angles))
    pe = pe.at[:, 1::2].set(jnp.cos(angles))
    return pe[None, :, :]                                                       # [1, max_len, d_model]


def _add_pe_kernel(x_ref, pe_ref, o_ref):
    # Pure elementwise, HBM-bandwidth-bound add.
    # x_ref / o_ref block: (Bb, TS, Dw); pe_ref block: (1, TS, Dw).
    # The leading size-1 dim of pe broadcasts over the batch tile on the VPU.
    o_ref[...] = x_ref[...] + pe_ref[...]


# Buffer budget for ALL double-buffered pipeline streams (x, out, pe) and the
# scoped VMEM limit handed to Mosaic.  48 MiB is safe on v5e/v6e (128 MiB
# physical VMEM) and leaves headroom under v7x's 64 MiB per-TensorCore VMEM.
_VMEM_BUF_BUDGET = 32 * 1024 * 1024
_VMEM_LIMIT_BYTES = 48 * 1024 * 1024


def _pick_seq_tile(Sw: int, Dw: int, Bb: int, itemsize: int,
                   budget: int = _VMEM_BUF_BUDGET) -> int:
    """Largest seq tile such that all double-buffered streams fit `budget`.

    Buffers: x (2 * Bb), out (2 * Bb), pe (2 * 1)  ->  (4*Bb + 2) * ts * Dw * itemsize.
    """
    row_bytes = Dw * itemsize
    denom = (4 * Bb + 2) * row_bytes
    cap = max(8, budget // denom)
    if Sw <= cap:
        return int(Sw)            # full-extent tile: legal even if not a multiple of 8
    return int(max(8, (cap // 8) * 8))


def positional_encoding_forward(x: jnp.ndarray, pe: jnp.ndarray) -> jnp.ndarray:
    """x: [B, S, D];  pe: [1, max_len, D]  ->  x + pe[:, :S]"""
    B, S, D = x.shape
    itemsize = jnp.dtype(x.dtype).itemsize

    # Glue outside the kernel: static slice + pre-cast (one-time, tiny table).
    pe_slice = pe[:, :S, :].astype(x.dtype)                                     # [1, S, D]

    # Lane-dense layout: if D isn't a multiple of 128, fold k consecutive
    # positions into one row (contiguous reshape == free) so the kernel's last
    # dim is a multiple of 128 and stores are full-width, unmasked vst.
    k = 1
    if D % 128 != 0:
        k_needed = 128 // math.gcd(D, 128)
        if S % k_needed == 0:
            k = k_needed
    Sw, Dw = S // k, D * k
    x_w = x.reshape(B, Sw, Dw)
    pe_w = pe_slice.reshape(1, Sw, Dw)

    # Fold the batch into the block (fat per-step DMA payloads).
    Bb = B if B <= 8 else 8
    n_b = pl.cdiv(B, Bb)

    ts = _pick_seq_tile(Sw, Dw, Bb, itemsize)
    n_s = pl.cdiv(Sw, ts)

    # v7x has 2 TensorCores: if the enlarged tiling collapsed to one grid step,
    # split the sequence so both cores get work (harmless on 1-TC chips).
    if n_s * n_b == 1 and Sw >= 16:
        ts = 8 * pl.cdiv(Sw, 16)
        n_s = pl.cdiv(Sw, ts)

    cost = pl.CostEstimate(
        flops=B * S * D,
        transcendentals=0,
        bytes_accessed=(2 * B * S * D + S * D) * itemsize,  # read x, write out, read pe once
    )

    out = pl.pallas_call(
        _add_pe_kernel,
        out_shape=jax.ShapeDtypeStruct((B, Sw, Dw), x.dtype),
        grid_spec=pltpu.PrefetchScalarGridSpec(
            num_scalar_prefetch=0,
            # s OUTER, b INNER: the pe block index only changes on the outer
            # axis, so the resident pe tile is reused across batch tiles.
            grid=(n_s, n_b),
            in_specs=[
                pl.BlockSpec((Bb, ts, Dw), lambda s, b: (b, s, 0)),   # x tile (batch folded in)
                pl.BlockSpec((1, ts, Dw), lambda s, b: (0, s, 0)),    # pe tile (batch-invariant)
            ],
            out_specs=pl.BlockSpec((Bb, ts, Dw), lambda s, b: (b, s, 0)),
        ),
        compiler_params=pltpu.CompilerParams(
            dimension_semantics=("parallel", "parallel"),
            vmem_limit_bytes=_VMEM_LIMIT_BYTES,
        ),
        cost_estimate=cost,
    )(x_w, pe_w)

    return out.reshape(B, S, D)


if __name__ == "__main__":
    # Small shapes consistent with the module's forward: [batch, seq_len, d_model]
    batch, seq_len, d_model = 2, 8, 32
    max_len = 64  # keep the table small; module default is 5000

    key = jax.random.PRNGKey(0)
    x = jax.random.normal(key, (batch, seq_len, d_model), dtype=jnp.float32)

    pe = build_positional_encoding_table(d_model, max_len=max_len)

    out = positional_encoding_forward(x, pe)
    out = jax.block_until_ready(out)

    # Reference check in plain JAX
    ref = x + pe[:, :seq_len, :].astype(x.dtype)
    assert out.shape == (batch, seq_len, d_model)
    assert jnp.allclose(out, ref, atol=1e-6), "mismatch vs reference"

    print("KERNEL_OK")
</pallas_src>

<mosaic_0001>
module attributes {stable_mosaic.version = 11 : i64} {
  func.func @_add_pe_kernel(%arg0: i32, %arg1: i32, %arg2: memref<2x2x128xf32, #tpu.memory_space<vmem>>, %arg3: memref<1x2x128xf32, #tpu.memory_space<vmem>>, %arg4: memref<2x2x128xf32, #tpu.memory_space<vmem>>) attributes {dimension_semantics = [#tpu.dimension_semantics<parallel>, #tpu.dimension_semantics<parallel>], iteration_bounds = array<i64: 1, 1>, scalar_prefetch = 0 : i64, scratch_operands = 0 : i64, tpu.core_type = #tpu.core_type<tc>, window_params = [{transform_indices = @transform_0, window_bounds = array<i64: 2, 2, 128>}, {transform_indices = @transform_1, window_bounds = array<i64: 1, 2, 128>}, {transform_indices = @transform_2, window_bounds = array<i64: 2, 2, 128>}]} {
    %c0 = arith.constant 0 : index
    %c0_0 = arith.constant 0 : index
    %c0_1 = arith.constant 0 : index
    %0 = vector.load %arg2[%c0, %c0_0, %c0_1] : memref<2x2x128xf32, #tpu.memory_space<vmem>>, vector<2x2x128xf32>
    %c0_2 = arith.constant 0 : index
    %c0_3 = arith.constant 0 : index
    %c0_4 = arith.constant 0 : index
    %1 = vector.load %arg3[%c0_2, %c0_3, %c0_4] : memref<1x2x128xf32, #tpu.memory_space<vmem>>, vector<1x2x128xf32>
    %2 = vector.broadcast %1 : vector<1x2x128xf32> to vector<2x2x128xf32>
    %3 = arith.addf %0, %2 : vector<2x2x128xf32>
    %c0_5 = arith.constant 0 : index
    %c0_6 = arith.constant 0 : index
    %c0_7 = arith.constant 0 : index
    %4 = vector.load %arg4[%c0_5, %c0_6, %c0_7] : memref<2x2x128xf32, #tpu.memory_space<vmem>>, vector<2x2x128xf32>
    tpu.vector_store %arg4[%c0_5, %c0_6, %c0_7], %3 {strides = array<i32>} : memref<2x2x128xf32, #tpu.memory_space<vmem>>, vector<2x2x128xf32>,
    return
  }
  func.func @transform_0(%arg0: i32, %arg1: i32) -> (i32, i32, i32) {
    %c0_i32 = arith.constant 0 : i32
    %c0_i32_0 = arith.constant 0 : i32
    return %arg1, %arg0, %c0_i32 : i32, i32, i32
  }
  func.func @transform_1(%arg0: i32, %arg1: i32) -> (i32, i32, i32) {
    %c0_i32 = arith.constant 0 : i32
    %c0_i32_0 = arith.constant 0 : i32
    %c0_i32_1 = arith.constant 0 : i32
    return %c0_i32, %arg0, %c0_i32_0 : i32, i32, i32
  }
  func.func @transform_2(%arg0: i32, %arg1: i32) -> (i32, i32, i32) {
    %c0_i32 = arith.constant 0 : i32
    %c0_i32_0 = arith.constant 0 : i32
    return %arg1, %arg0, %c0_i32 : i32, i32, i32
  }
}

</mosaic_0001>

<llo_original>
// kernel: tpu_custom_call.1
$region0: #{tpu_custom_call.1}
  #allocation0 [shape = 'u32[]', space=smem, size = 0x4, offset = 0x4, fixed_abs, tag = 'smem constant byte address 0x4 - core index']
  #allocation1 [shape = 'u32[144,128]{1,0:T(1,128)}', space=vmem, size = 0x12000, scoped, tag = 'internal scratch']
  %s0 = inlined_call_operand.hbm [shape: f32[2,2,128], index: 0, kind: input, shape index: {}]
  %s1 = inlined_call_operand.hbm [shape: f32[1,2,128], index: 1, kind: input, shape index: {}]
  %s2 = inlined_call_operand.hbm [shape: f32[2,2,128], index: 2, kind: output, shape index: {}]
  %s3 = sld [smem:[#allocation0]]
  $region26: #{tpu_custom_call.1} parent=0
    _
  %s5 = ssub.s32 1, %s3
  %s6 = scalar_select 0, %s5, %s3
  $region1: #{tpu_custom_call.1} parent=0
    #allocation2 [shape = 'u8[2048]{0}', space=vmem, size = 0x800, scoped, tag = 'input window, operand 0, single buffered']
    #allocation3 [shape = 's32[1]{0}', space=sflag, size = 0x4, scoped, tag = 'scoped memory for tpu_custom_call.1']
    #allocation4 [shape = 's32[1]{0}', space=sflag, size = 0x4, scoped, tag = 'scoped memory for tpu_custom_call.1']
    #allocation5 [shape = 'u8[1024]{0}', space=vmem, size = 0x400, scoped, tag = 'input window, operand 1, single buffered']
    #allocation6 [shape = 's32[1]{0}', space=sflag, size = 0x4, scoped, tag = 'scoped memory for tpu_custom_call.1']
    #allocation7 [shape = 'u8[2048]{0}', space=vmem, size = 0x800, scoped, tag = 'output window, operand 0, single buffered']
    %7 = vsyncpa [#allocation3], 0
    %8 = vsyncpa [#allocation6], 0
    %9 = vsyncpa [#allocation4], 0
    // Predicated region
    $region2: #{tpu_custom_call.1} parent=1 // pred_check
      _
    $region3: #{tpu_custom_call.1} parent=1 // pred_check_branch
      %11 = sbr.rel (0) target = $region5
    $region4: #{tpu_custom_call.1} parent=1 // pred_region
      %s13 = ssub.s32 64, 64
      %14 = vsyncadd [#allocation3], %s13
      %s15 = sshll.u32 [#allocation2], 4
      %s16 = int_to_ptr.vmem [resolvable:$true] %s15
      %21 = dma.hbm_to_vmem [thread:$0]  %s0, 64, %s16, [#allocation3], 32, 32, 2
    $region5: #{tpu_custom_call.1} parent=1 // pred_fallthru
      _
    // Predicated region
    $region6: #{tpu_custom_call.1} parent=1 // pred_check
      _
    $region7: #{tpu_custom_call.1} parent=1 // pred_check_branch
      %23 = sbr.rel (0) target = $region9
    $region8: #{tpu_custom_call.1} parent=1 // pred_region
      %s25 = ssub.s32 32, 32
      %26 = vsyncadd [#allocation6], %s25
      %s28 = sshll.u32 [#allocation5], 4
      %s29 = int_to_ptr.vmem [resolvable:$true] %s28
      %31 = dma.hbm_to_vmem [thread:$0]  %s1, 32, %s29, [#allocation6]
    $region9: #{tpu_custom_call.1} parent=1 // pred_fallthru
      _
    // Predicated region
    $region10: #{tpu_custom_call.1} parent=1 // pred_check
      _
    $region11: #{tpu_custom_call.1} parent=1 // pred_check_branch
      %33 = sbr.rel (0) target = $region13
    $region12: #{tpu_custom_call.1} parent=1 // pred_region
      %34 = dma.done [#allocation3], 64
    $region13: #{tpu_custom_call.1} parent=1 // pred_fallthru
      _
    // Predicated region
    $region14: #{tpu_custom_call.1} parent=1 // pred_check
      _
    $region15: #{tpu_custom_call.1} parent=1 // pred_check_branch
      %36 = sbr.rel (0) target = $region17
    $region16: #{tpu_custom_call.1} parent=1 // pred_region
      %37 = dma.done [#allocation6], 32
    $region17: #{tpu_custom_call.1} parent=1 // pred_fallthru
      _
    %v38 = vld [vmem:[#allocation2] sm:$0x3]
    %v39 = vld [vmem:[#allocation2 + $0x2] sm:$0x3]
    %v40 = vld [vmem:[#allocation5] sm:$0x3]
    %v41 = vadd.f32 %v38, %v40
    %v42 = vadd.f32 %v39, %v40
    %43 = vst [vmem:[#allocation7] sm:$0x3] %v41
    %44 = vst [vmem:[#allocation7 + $0x2] sm:$0x3] %v42
    // Predicated region
    $region18: #{tpu_custom_call.1} parent=1 // pred_check
      _
    $region19: #{tpu_custom_call.1} parent=1 // pred_check_branch
      %46 = sbr.rel (0) target = $region21
    $region20: #{tpu_custom_call.1} parent=1 // pred_region
      %s48 = ssub.s32 64, 64
      %49 = vsyncadd [#allocation4], %s48
      %s50 = sshll.u32 [#allocation7], 4
      %s51 = int_to_ptr.vmem [resolvable:$true] %s50
      %56 = dma.vmem_to_hbm [thread:$0]  %s51, 64, %s2, [#allocation4], 32, 32, 2
    $region21: #{tpu_custom_call.1} parent=1 // pred_fallthru
      _
    // Predicated region
    $region22: #{tpu_custom_call.1} parent=1 // pred_check
      _
    $region23: #{tpu_custom_call.1} parent=1 // pred_check_branch
      %58 = sbr.rel (0) target = $region25
    $region24: #{tpu_custom_call.1} parent=1 // pred_region
      %59 = dma.done [#allocation4], 64
    $region25: #{tpu_custom_call.1} parent=1 // pred_fallthru
      _
    %60 = vsyncpa [#allocation3], 1
    %61 = vsyncpa [#allocation6], 1
    %62 = vsyncpa [#allocation4], 1

</llo_original>
